<compile_context>
chip_gen: v5e
topology: v5e:2x2
jax: 0.10.0
libtpu: 0.0.40
codegen_flags: <defaults>
</compile_context>

<pallas_src>
import functools

import jax
import jax.numpy as jnp
from jax.experimental import pallas as pl
from jax.experimental.pallas import tpu as pltpu

_LANE = 128
# itemsize (bytes) -> packed-sublane granularity of the second-to-last dim
_MIN_SUBLANE = {4: 8, 2: 16, 1: 32}


def _relu6_kernel(x_ref, o_ref):
    # jnp.clip with weak-typed scalars preserves the input dtype; the kernel
    # is DMA-bound so nothing else belongs in the body.
    o_ref[...] = jnp.clip(x_ref[...], 0, 6)


@functools.lru_cache(maxsize=1)
def _chip_config():
    """Return (block_target_bytes, is_multi_tensorcore) for the local TPU."""
    kind = ""
    try:
        kind = jax.devices()[0].device_kind.lower()
    except Exception:
        pass
    if "v7" in kind or "7x" in kind:
        # v7x: ~3.2 TB/s HBM -> bigger blocks amortize the ~0.35us/step cost.
        return 4 * 1024 * 1024, True
    if "v6" in kind:
        # v6e: single TC; 4 MiB blocks stay well under the 32 MiB scoped VMEM.
        return 4 * 1024 * 1024, False
    # v5e (16 MiB scoped VMEM default) and unknown chips: conservative 2 MiB.
    return 2 * 1024 * 1024, False


def _choose_cols(n):
    """Widest lane-dense column count that divides n (prefer >= 8 rows)."""
    widths = (2048, 1024, 512, 256, 128)
    for w in widths:
        if n % w == 0 and n // w >= 8:
            return w
    for w in widths:
        if n % w == 0:
            return w
    return 0


def _relu6_2d(x2d, *, donate_input=False):
    """ReLU6 on a lane-dense (rows, cols) slab via a single pallas_call."""
    rows, cols = x2d.shape
    dtype = x2d.dtype
    itemsize = jnp.dtype(dtype).itemsize
    sublane = _MIN_SUBLANE[itemsize]
    target_bytes, multi_tc = _chip_config()

    if rows <= sublane:
        block_rows = rows  # full-extent block on the row axis: always legal
    else:
        block_rows = max(sublane,
                         (target_bytes // (cols * itemsize)) // sublane * sublane)
        if multi_tc:
            # v7x megacore: keep >= 2 grid steps and an even step count so the
            # parallel axis splits evenly across both TensorCores.
            steps = pl.cdiv(rows, block_rows)
            if steps == 1:
                block_rows = pl.cdiv(pl.cdiv(rows, 2), sublane) * sublane
            elif steps % 2 == 1:
                block_rows = pl.cdiv(pl.cdiv(rows, steps + 1), sublane) * sublane
            block_rows = max(block_rows, sublane)
        if block_rows >= rows:
            block_rows = rows  # single full-extent block (no forced split)

    extra = {}
    if donate_input:
        # Only enable when the caller donates x at the jit boundary; otherwise
        # XLA inserts a defensive copy that costs an extra HBM pass.
        extra["input_output_aliases"] = {0: 0}

    n_elems = rows * cols
    return pl.pallas_call(
        _relu6_kernel,
        out_shape=jax.ShapeDtypeStruct((rows, cols), dtype),
        grid=(pl.cdiv(rows, block_rows),),
        in_specs=[pl.BlockSpec((block_rows, cols), lambda i: (i, 0))],
        out_specs=pl.BlockSpec((block_rows, cols), lambda i: (i, 0)),
        compiler_params=pltpu.CompilerParams(
            dimension_semantics=("parallel",)),
        cost_estimate=pl.CostEstimate(
            flops=2 * n_elems,
            transcendentals=0,
            bytes_accessed=2 * n_elems * itemsize),
        **extra,
    )(x2d)


def relu6_pallas(x, *, donate_input=False):
    """ReLU6 on an arbitrary-shaped array via a Pallas TPU kernel."""
    orig_shape = x.shape
    dtype = x.dtype
    n = x.size
    itemsize = jnp.dtype(dtype).itemsize
    if itemsize not in _MIN_SUBLANE:
        raise ValueError(
            f"relu6_pallas: unsupported dtype {dtype} (itemsize {itemsize}); "
            "supported: 1-, 2- and 4-byte dtypes.")
    if n == 0:
        return x

    cols = _choose_cols(n)
    if cols:
        # Common case: zero-copy reshape to a lane-dense 2-D slab.
        out2d = _relu6_2d(x.reshape(n // cols, cols), donate_input=donate_input)
        return out2d.reshape(orig_shape)

    # Ragged case (n not a multiple of 128): run the kernel on the largest
    # lane-dense prefix and clip the tiny tail in the wrapper (XLA fuses it).
    bulk = (n // _LANE) * _LANE
    flat = x.reshape(-1)
    if bulk == 0:
        return jnp.clip(x, 0, 6)
    cols_b = _choose_cols(bulk)
    head = _relu6_2d(flat[:bulk].reshape(bulk // cols_b, cols_b))
    tail = jnp.clip(flat[bulk:], 0, 6)
    return jnp.concatenate([head.reshape(-1), tail]).reshape(orig_shape)


if __name__ == "__main__":
    key = jax.random.PRNGKey(0)
    # Small NCHW-style input consistent with the module: (2, 4, 16, 16)
    x = jax.random.normal(key, (2, 4, 16, 16), dtype=jnp.float32) * 5.0

    y = relu6_pallas(x)
    jax.block_until_ready(y)

    y_ref = jnp.clip(x, 0.0, 6.0)
    assert y.shape == x.shape
    assert y.dtype == x.dtype
    assert jnp.allclose(y, y_ref), "mismatch vs reference relu6"

    # Ragged flat size (255 = 128 + 127): exercises the bulk+tail path.
    x2 = jax.random.normal(jax.random.PRNGKey(1), (3, 5, 17), dtype=jnp.float32) * 4.0
    assert jnp.allclose(relu6_pallas(x2), jnp.clip(x2, 0.0, 6.0))

    # bf16 input (sublane=16 packing path).
    x3 = (jax.random.normal(jax.random.PRNGKey(2), (2, 4, 16, 16)) * 5.0).astype(jnp.bfloat16)
    assert jnp.allclose(relu6_pallas(x3).astype(jnp.float32),
                        jnp.clip(x3.astype(jnp.float32), 0.0, 6.0))

    print("KERNEL_OK")
</pallas_src>

<mosaic_0001>
module attributes {stable_mosaic.version = 11 : i64} {
  func.func @_relu6_kernel(%arg0: i32, %arg1: memref<8x256xf32, #tpu.memory_space<vmem>>, %arg2: memref<8x256xf32, #tpu.memory_space<vmem>>) attributes {dimension_semantics = [#tpu.dimension_semantics<parallel>], iteration_bounds = array<i64: 1>, scalar_prefetch = 0 : i64, scratch_operands = 0 : i64, tpu.core_type = #tpu.core_type<tc>, window_params = [{transform_indices = @transform_0, window_bounds = array<i64: 8, 256>}, {transform_indices = @transform_1, window_bounds = array<i64: 8, 256>}]} {
    %c0 = arith.constant 0 : index
    %c0_0 = arith.constant 0 : index
    %0 = vector.load %arg1[%c0, %c0_0] : memref<8x256xf32, #tpu.memory_space<vmem>>, vector<8x256xf32>
    %c0_i32 = arith.constant 0 : i32
    %c6_i32 = arith.constant 6 : i32
    %1 = arith.sitofp %c0_i32 : i32 to f32
    %2 = vector.broadcast %1 : f32 to vector<8x256xf32>
    %3 = arith.maximumf %2, %0 : vector<8x256xf32>
    %4 = arith.sitofp %c6_i32 : i32 to f32
    %5 = vector.broadcast %4 : f32 to vector<8x256xf32>
    %6 = arith.minimumf %5, %3 : vector<8x256xf32>
    %c0_1 = arith.constant 0 : index
    %c0_2 = arith.constant 0 : index
    %7 = vector.load %arg2[%c0_1, %c0_2] : memref<8x256xf32, #tpu.memory_space<vmem>>, vector<8x256xf32>
    tpu.vector_store %arg2[%c0_1, %c0_2], %6 {strides = array<i32>} : memref<8x256xf32, #tpu.memory_space<vmem>>, vector<8x256xf32>,
    return
  }
  func.func @transform_0(%arg0: i32) -> (i32, i32) {
    %c0_i32 = arith.constant 0 : i32
    %c0_i32_0 = arith.constant 0 : i32
    return %arg0, %c0_i32 : i32, i32
  }
  func.func @transform_1(%arg0: i32) -> (i32, i32) {
    %c0_i32 = arith.constant 0 : i32
    %c0_i32_0 = arith.constant 0 : i32
    return %arg0, %c0_i32 : i32, i32
  }
}

</mosaic_0001>

<llo_original>
// kernel: tpu_custom_call.1
$region0: #{tpu_custom_call.1}
  #allocation0 [shape = 'u32[]', space=smem, size = 0x4, offset = 0x4, fixed_abs, tag = 'smem constant byte address 0x4 - core index']
  #allocation1 [shape = 'u32[72,128]{1,0:T(1,128)}', space=vmem, size = 0x9000, scoped, tag = 'internal scratch']
  %s0 = inlined_call_operand.hbm [shape: f32[8,256], index: 0, kind: input, shape index: {}]
  %s1 = inlined_call_operand.hbm [shape: f32[8,256], index: 1, kind: output, shape index: {}]
  %s2 = sld [smem:[#allocation0]]
  $region18: #{tpu_custom_call.1} parent=0
    _
  %s4 = ssub.s32 1, %s2
  %s5 = scalar_select 0, %s4, %s2
  $region1: #{tpu_custom_call.1} parent=0
    #allocation2 [shape = 'u8[8192]{0}', space=vmem, size = 0x2000, scoped, tag = 'input window, operand 0, single buffered']
    #allocation3 [shape = 's32[1]{0}', space=sflag, size = 0x4, scoped, tag = 'scoped memory for tpu_custom_call.1']
    #allocation4 [shape = 's32[1]{0}', space=sflag, size = 0x4, scoped, tag = 'scoped memory for tpu_custom_call.1']
    #allocation5 [shape = 'u8[8192]{0}', space=vmem, size = 0x2000, scoped, tag = 'output window, operand 0, single buffered']
    %6 = vsyncpa [#allocation3], 0
    %7 = vsyncpa [#allocation4], 0
    // Predicated region
    $region2: #{tpu_custom_call.1} parent=1 // pred_check
      _
    $region3: #{tpu_custom_call.1} parent=1 // pred_check_branch
      %9 = sbr.rel (0) target = $region5
    $region4: #{tpu_custom_call.1} parent=1 // pred_region
      %11 = vsyncadd [#allocation3], 0
      %s13 = sshll.u32 %s0, 4
      %s14 = int_to_ptr.hbm [resolvable:$true] %s13
      %s15 = sshll.u32 [#allocation2], 4
      %s16 = int_to_ptr.vmem [resolvable:$true] %s15
      %18 = dma.hbm_to_vmem [thread:$0]  %s14, 256, %s16, [#allocation3]
    $region5: #{tpu_custom_call.1} parent=1 // pred_fallthru
      _
    // Predicated region
    $region6: #{tpu_custom_call.1} parent=1 // pred_check
      _
    $region7: #{tpu_custom_call.1} parent=1 // pred_check_branch
      %20 = sbr.rel (0) target = $region9
    $region8: #{tpu_custom_call.1} parent=1 // pred_region
      %22 = dma.done [#allocation3], 256
    $region9: #{tpu_custom_call.1} parent=1 // pred_fallthru
      _
    %v23 = vld [vmem:[#allocation2] sm:$0xff]
    %v24 = vld [vmem:[#allocation2 + $0x8] sm:$0xff]
    %v25 = vmax.f32 %v23, 0.0
    %v26 = vmax.f32 %v24, 0.0
    %v27 = vmin.f32 %v25, 6.0
    %v28 = vmin.f32 %v26, 6.0
    %29 = vst [vmem:[#allocation5] sm:$0xff] %v27
    %30 = vst [vmem:[#allocation5 + $0x8] sm:$0xff] %v28
    // Predicated region
    $region10: #{tpu_custom_call.1} parent=1 // pred_check
      _
    $region11: #{tpu_custom_call.1} parent=1 // pred_check_branch
      %32 = sbr.rel (0) target = $region13
    $region12: #{tpu_custom_call.1} parent=1 // pred_region
      %34 = vsyncadd [#allocation4], 0
      %s36 = sshll.u32 [#allocation5], 4
      %s37 = int_to_ptr.vmem [resolvable:$true] %s36
      %s38 = sshll.u32 %s1, 4
      %s39 = int_to_ptr.hbm [resolvable:$true] %s38
      %41 = dma.vmem_to_hbm [thread:$0]  %s37, 256, %s39, [#allocation4]
    $region13: #{tpu_custom_call.1} parent=1 // pred_fallthru
      _
    // Predicated region
    $region14: #{tpu_custom_call.1} parent=1 // pred_check
      _
    $region15: #{tpu_custom_call.1} parent=1 // pred_check_branch
      %43 = sbr.rel (0) target = $region17
    $region16: #{tpu_custom_call.1} parent=1 // pred_region
      %45 = dma.done [#allocation4], 256
    $region17: #{tpu_custom_call.1} parent=1 // pred_fallthru
      _
    %46 = vsyncpa [#allocation3], 1
    %47 = vsyncpa [#allocation4], 1

</llo_original>
